<compile_context>
chip_gen: v7x
topology: tpu7x:2x2x1
jax: 0.10.0
libtpu: 0.0.40
codegen_flags: <defaults>
</compile_context>

<pallas_src>
import functools

import jax
import jax.numpy as jnp
from jax.experimental import pallas as pl
from jax.experimental.pallas import tpu as pltpu

LN_EPS = 1e-5                      # CLIP layer_norm_eps
NEG_BIG = -1e30                    # additive mask value for padded key positions


def _round_up(x, m):
    return (x + m - 1) // m * m


# --------------------------------------------------------------------------------------
# Hardware-/version-dependent knobs
# --------------------------------------------------------------------------------------
@functools.lru_cache(maxsize=None)
def _vmem_limit_bytes():
    """Generation-dependent scoped-VMEM budget (leave headroom for compiler scratch)."""
    cap = 128 * 1024 * 1024
    try:
        cap = int(pltpu.get_tpu_info().vmem_capacity_bytes)
    except Exception:
        pass
    if cap >= 128 * 1024 * 1024:
        return 100 * 1024 * 1024                      # v5e / v6e: 128 MiB physical
    return max(32 * 1024 * 1024, (cap * 3) // 4)      # v7x: ~48 MiB of 64 MiB


def _cparams(*sem):
    return pltpu.CompilerParams(dimension_semantics=sem,
                                vmem_limit_bytes=_vmem_limit_bytes())


_SINGLE_BUFFER_OK = None


def _single_buffer_supported():
    """Probe whether pl.BlockSpec(..., pipeline_mode=pl.Buffered(1)) works here."""
    global _SINGLE_BUFFER_OK
    if _SINGLE_BUFFER_OK is not None:
        return _SINGLE_BUFFER_OK
    ok = False
    try:
        def _copy(x_ref, o_ref):
            o_ref[...] = x_ref[...]

        spec = pl.BlockSpec((8, 128), lambda i: (0, 0), pipeline_mode=pl.Buffered(1))
        fn = pl.pallas_call(
            _copy,
            out_shape=jax.ShapeDtypeStruct((8, 128), jnp.float32),
            grid=(1,),
            in_specs=[spec],
            out_specs=pl.BlockSpec((8, 128), lambda i: (0, 0)),
        )
        jax.block_until_ready(fn(jnp.zeros((8, 128), jnp.float32)))
        ok = True
    except Exception:
        ok = False
    _SINGLE_BUFFER_OK = ok
    return ok


def _const_spec(shape):
    """BlockSpec for weights/biases whose block index never changes across the grid.

    Single-buffered when supported: nothing to overlap (block never re-DMAs), and it
    halves the resident weight VMEM — needed to fit v7x's 64 MiB."""
    idx_map = lambda *args: (0,) * len(shape)
    if _single_buffer_supported():
        return pl.BlockSpec(shape, idx_map, pipeline_mode=pl.Buffered(1))
    return pl.BlockSpec(shape, idx_map)


def _pick_mlp_chunk(inter, target=512):
    """Chunk of the MLP intermediate dim: multiple of 128 dividing `inter` (else whole)."""
    if inter <= target or inter % 128:
        return inter
    chunk = 128
    for c in range(128, target + 1, 128):
        if inter % c == 0:
            chunk = c
    return chunk


def _choose_seq_tiling(seq, batch, max_tile=256):
    """Pad seq to a multiple of 8 and pick a tile (multiple of 8) that divides it.

    Preference: minimal padding waste; an even total program count (v7x's two
    TensorCores) may win if it costs only a little extra padding; larger tiles."""
    base = _round_up(seq, 8)
    min_tile = min(64, base)
    cands = []
    for extra in range(0, max_tile + 8, 8):
        s_pad = base + extra
        t = min(max_tile, s_pad)
        t -= t % 8
        while t >= min_tile and s_pad % t:
            t -= 8
        if t < min_tile:
            continue
        cands.append((s_pad - seq, s_pad, t, s_pad // t))
    if not cands:
        return base, base
    best_waste = min(c[0] for c in cands)
    slack = best_waste + max(16, seq // 8)

    def key(c):
        waste, _s_pad, t, n = c
        even = (batch * n) % 2 == 0
        return (waste > slack, not even, waste, -t)

    _, s_pad, t, _ = min(cands, key=key)
    return s_pad, t


# --------------------------------------------------------------------------------------
# Kernels
# --------------------------------------------------------------------------------------
def _ln(x, g, b):
    mu = jnp.mean(x, axis=-1, keepdims=True)
    var = jnp.mean((x - mu) ** 2, axis=-1, keepdims=True)
    return (x - mu) * jax.lax.rsqrt(var + LN_EPS) * g + b


def matmul_kernel(x_ref, w_ref, o_ref):
    # Patch-embedding conv expressed as a matmul over flattened patches (bf16 in, f32 acc).
    o_ref[...] = jnp.dot(
        x_ref[...], w_ref[...], preferred_element_type=jnp.float32
    ).astype(o_ref.dtype)


def pre_layernorm_kernel(x_ref, g_ref, b_ref, o_ref):
    x = x_ref[0].astype(jnp.float32)
    o_ref[0] = _ln(x, g_ref[...], b_ref[...]).astype(o_ref.dtype)


def qkv_kernel(x_ref, g_ref, b_ref, w_ref, bias_ref, q_ref, k_ref, v_ref,
               *, num_heads, head_dim, scale):
    # One sequence tile: LN1 then fused QKV projection, written out head-major (H, t, dh).
    tq = x_ref.shape[1]
    D = x_ref.shape[2]
    H, dh = num_heads, head_dim

    x = x_ref[0].astype(jnp.float32)
    h = _ln(x, g_ref[...], b_ref[...]).astype(jnp.bfloat16)
    qkv = jnp.dot(h, w_ref[...], preferred_element_type=jnp.float32) + bias_ref[...]

    q = qkv[:, :D] * scale
    k = qkv[:, D:2 * D]
    v = qkv[:, 2 * D:]

    def to_heads(t):  # (tq, D) -> (H, tq, dh), once per layer per tile (not per q-tile pair)
        return jnp.transpose(t.reshape(tq, H, dh), (1, 0, 2)).astype(jnp.bfloat16)

    q_ref[0] = to_heads(q)
    k_ref[0] = to_heads(k)
    v_ref[0] = to_heads(v)


def flash_attn_kernel(q_ref, k_ref, v_ref, o_ref, m_sc, l_sc, acc_sc,
                      *, seq_valid, key_tile):
    # Online-softmax attention over key tiles; scores bounded to (H, tq, tk).
    kidx = pl.program_id(2)

    @pl.when(kidx == 0)
    def _():
        m_sc[...] = jnp.full_like(m_sc, -jnp.inf)
        l_sc[...] = jnp.zeros_like(l_sc)
        acc_sc[...] = jnp.zeros_like(acc_sc)

    q = q_ref[0]                                            # (H, tq, dh) bf16 (pre-scaled)
    k = k_ref[0]                                            # (H, tk, dh) bf16
    v = v_ref[0]

    s = jnp.einsum('hqd,hkd->hqk', q, k,
                   preferred_element_type=jnp.float32)      # (H, tq, tk)

    # tile-local additive padding mask (only (1, tk) of VPU work, not score-sized)
    key_pos = jax.lax.broadcasted_iota(jnp.int32, (1, key_tile), 1) + kidx * key_tile
    bias = jnp.where(key_pos < seq_valid, 0.0, NEG_BIG)
    s = s + bias[None, :, :]

    m_new = jnp.maximum(m_sc[...], jnp.max(s, axis=-1, keepdims=True))
    alpha = jnp.exp(m_sc[...] - m_new)
    p = jnp.exp(s - m_new)
    l_sc[...] = alpha * l_sc[...] + jnp.sum(p, axis=-1, keepdims=True)
    acc_sc[...] = alpha * acc_sc[...] + jnp.einsum(
        'hqk,hkd->hqd', p.astype(jnp.bfloat16), v, preferred_element_type=jnp.float32)
    m_sc[...] = m_new

    @pl.when(kidx == pl.num_programs(2) - 1)
    def _():
        # normalize AFTER the PV matmul: (H, tq, dh) multiply instead of (H, tq, S_pad)
        ctx = acc_sc[...] * pl.reciprocal(l_sc[...], approx=True)
        H, tq, dh = ctx.shape
        o_ref[0] = jnp.transpose(ctx, (1, 0, 2)).reshape(tq, H * dh).astype(o_ref.dtype)


def out_mlp_kernel(x_ref, ctx_ref, wo_ref, bo_ref, ln2g_ref, ln2b_ref,
                   w1_ref, b1_ref, w2_ref, b2_ref, o_ref, h2_sc, acc_sc):
    # Output projection + residual + LN2 + quick_gelu MLP, streamed over the
    # intermediate dimension (w1/w2 chunks arrive via the innermost grid axis).
    c = pl.program_id(2)

    @pl.when(c == 0)
    def _():
        attn = jnp.dot(ctx_ref[0], wo_ref[...],
                       preferred_element_type=jnp.float32) + bo_ref[...]
        xr = x_ref[0].astype(jnp.float32) + attn            # residual (f32)
        h2_sc[...] = _ln(xr, ln2g_ref[...], ln2b_ref[...]).astype(jnp.bfloat16)
        acc_sc[...] = xr + b2_ref[...]                      # residual + final bias

    mc = jnp.dot(h2_sc[...], w1_ref[...],
                 preferred_element_type=jnp.float32) + b1_ref[...]
    mc = mc * jax.nn.sigmoid(1.702 * mc)                    # quick_gelu
    acc_sc[...] += jnp.dot(mc.astype(jnp.bfloat16), w2_ref[...],
                           preferred_element_type=jnp.float32)

    @pl.when(c == pl.num_programs(2) - 1)
    def _():
        o_ref[0] = acc_sc[...].astype(o_ref.dtype)


# --------------------------------------------------------------------------------------
# Pallas wrappers
# --------------------------------------------------------------------------------------
def patch_embed_matmul(patches, w_t, *, row_tile=512):
    # patches: (B*P, K_pad) bf16, w_t: (K_pad, D) bf16 -> (B*P, D) f32
    M, K = patches.shape
    D = w_t.shape[1]
    tile = M if M <= row_tile else row_tile
    return pl.pallas_call(
        matmul_kernel,
        out_shape=jax.ShapeDtypeStruct((M, D), jnp.float32),
        grid=(pl.cdiv(M, tile),),
        in_specs=[
            pl.BlockSpec((tile, K), lambda i: (i, 0)),
            _const_spec((K, D)),
        ],
        out_specs=pl.BlockSpec((tile, D), lambda i: (i, 0)),
        compiler_params=_cparams("parallel"),
    )(patches, w_t)


def pre_layernorm(x, g, b, *, seq_tile):
    # x: (B, S_pad, D) f32 -> (B, S_pad, D) bf16 hidden state
    B, S_pad, D = x.shape
    return pl.pallas_call(
        pre_layernorm_kernel,
        out_shape=jax.ShapeDtypeStruct((B, S_pad, D), jnp.bfloat16),
        grid=(B, S_pad // seq_tile),
        in_specs=[
            pl.BlockSpec((1, seq_tile, D), lambda bi, i: (bi, i, 0)),
            _const_spec((1, D)),
            _const_spec((1, D)),
        ],
        out_specs=pl.BlockSpec((1, seq_tile, D), lambda bi, i: (bi, i, 0)),
        compiler_params=_cparams("parallel", "parallel"),
    )(x, g, b)


def qkv_projection(x, lp, *, num_heads, seq_tile):
    # LN1 + fused QKV once per layer over row tiles (hoisted out of the q-tile loop).
    B, S_pad, D = x.shape
    H = num_heads
    dh = D // H
    kern = functools.partial(qkv_kernel, num_heads=H, head_dim=dh,
                             scale=float(dh) ** -0.5)
    out_sds = jax.ShapeDtypeStruct((B, H, S_pad, dh), jnp.bfloat16)
    out_spec = pl.BlockSpec((1, H, seq_tile, dh), lambda b, i: (b, 0, i, 0))
    return pl.pallas_call(
        kern,
        out_shape=(out_sds, out_sds, out_sds),
        grid=(B, S_pad // seq_tile),
        in_specs=[
            pl.BlockSpec((1, seq_tile, D), lambda b, i: (b, i, 0)),
            _const_spec((1, D)), _const_spec((1, D)),
            _const_spec((D, 3 * D)), _const_spec((1, 3 * D)),
        ],
        out_specs=(out_spec, out_spec, out_spec),
        compiler_params=_cparams("parallel", "parallel"),
    )(x, lp["ln1_g"], lp["ln1_b"], lp["wqkv"], lp["bqkv"])


def flash_attention(q, k, v, *, seq_tile, key_tile, seq_valid):
    # q, k, v: (B, H, S_pad, dh) bf16 (q pre-scaled) -> ctx (B, S_pad, D) bf16
    B, H, S_pad, dh = q.shape
    D = H * dh
    kern = functools.partial(flash_attn_kernel, seq_valid=seq_valid, key_tile=key_tile)
    return pl.pallas_call(
        kern,
        out_shape=jax.ShapeDtypeStruct((B, S_pad, D), jnp.bfloat16),
        grid=(B, S_pad // seq_tile, S_pad // key_tile),
        in_specs=[
            pl.BlockSpec((1, H, seq_tile, dh), lambda b, i, kk: (b, 0, i, 0)),
            pl.BlockSpec((1, H, key_tile, dh), lambda b, i, kk: (b, 0, kk, 0)),
            pl.BlockSpec((1, H, key_tile, dh), lambda b, i, kk: (b, 0, kk, 0)),
        ],
        out_specs=pl.BlockSpec((1, seq_tile, D), lambda b, i, kk: (b, i, 0)),
        scratch_shapes=[
            pltpu.VMEM((H, seq_tile, 1), jnp.float32),     # running max m
            pltpu.VMEM((H, seq_tile, 1), jnp.float32),     # running sum l
            pltpu.VMEM((H, seq_tile, dh), jnp.float32),    # acc
        ],
        compiler_params=_cparams("parallel", "parallel", "arbitrary"),
    )(q, k, v)


def out_proj_mlp(x, ctx, lp, *, seq_tile, mlp_chunk):
    # x, ctx: (B, S_pad, D) bf16 -> next hidden state (B, S_pad, D) bf16
    B, S_pad, D = x.shape
    inter = lp["w1"].shape[1]
    return pl.pallas_call(
        out_mlp_kernel,
        out_shape=jax.ShapeDtypeStruct((B, S_pad, D), jnp.bfloat16),
        grid=(B, S_pad // seq_tile, inter // mlp_chunk),
        in_specs=[
            pl.BlockSpec((1, seq_tile, D), lambda b, i, c: (b, i, 0)),
            pl.BlockSpec((1, seq_tile, D), lambda b, i, c: (b, i, 0)),
            _const_spec((D, D)), _const_spec((1, D)),
            _const_spec((1, D)), _const_spec((1, D)),
            pl.BlockSpec((D, mlp_chunk), lambda b, i, c: (0, c)),   # w1 streamed by chunk
            pl.BlockSpec((1, mlp_chunk), lambda b, i, c: (0, c)),   # b1 streamed by chunk
            pl.BlockSpec((mlp_chunk, D), lambda b, i, c: (c, 0)),   # w2 streamed by chunk
            _const_spec((1, D)),
        ],
        out_specs=pl.BlockSpec((1, seq_tile, D), lambda b, i, c: (b, i, 0)),
        scratch_shapes=[
            pltpu.VMEM((seq_tile, D), jnp.bfloat16),       # LN2(x + attn)
            pltpu.VMEM((seq_tile, D), jnp.float32),        # residual + MLP accumulator
        ],
        compiler_params=_cparams("parallel", "parallel", "arbitrary"),
    )(x, ctx, lp["wo"], lp["bo"], lp["ln2_g"], lp["ln2_b"],
      lp["w1"], lp["b1"], lp["w2"], lp["b2"])


def encoder_layer(x, lp, *, num_heads, seq_tile, seq_valid):
    q, k, v = qkv_projection(x, lp, num_heads=num_heads, seq_tile=seq_tile)
    ctx = flash_attention(q, k, v, seq_tile=seq_tile, key_tile=seq_tile,
                          seq_valid=seq_valid)
    mlp_chunk = _pick_mlp_chunk(lp["w1"].shape[1])
    return out_proj_mlp(x, ctx, lp, seq_tile=seq_tile, mlp_chunk=mlp_chunk)


# --------------------------------------------------------------------------------------
# Model (synthetic, deterministic parameters)
# --------------------------------------------------------------------------------------
def init_params(key, *, channels, patch, num_patches, hidden, intermediate, layers):
    seq = num_patches + 1
    counter = [0]

    def nrm(shape, scale=0.02):
        counter[0] += 1
        return scale * jax.random.normal(
            jax.random.fold_in(key, counter[0]), shape, dtype=jnp.float32)

    def w_bf16(shape, scale=0.02):
        return nrm(shape, scale).astype(jnp.bfloat16)

    params = {
        # Conv2d(C, D, kernel=patch, stride=patch, bias=False); stored pre-flattened /
        # pre-transposed as (C*patch*patch, D) bf16 for the matmul kernel.
        "patch_w": w_bf16((channels * patch * patch, hidden)),
        "cls": nrm((hidden,)),
        "pos": nrm((seq, hidden)),
        "pre_ln_g": 1.0 + nrm((1, hidden), 0.1),
        "pre_ln_b": nrm((1, hidden), 0.1),
        "layers": [],
    }
    for _ in range(layers):
        lp = {
            "ln1_g": 1.0 + nrm((1, hidden), 0.1),
            "ln1_b": nrm((1, hidden), 0.1),
            # Fused q/k/v projection (in, out) orientation: y = x @ Wqkv + bqkv, [q|k|v].
            "wqkv": w_bf16((hidden, 3 * hidden)),
            "bqkv": nrm((1, 3 * hidden)),
            "wo": w_bf16((hidden, hidden)), "bo": nrm((1, hidden)),
            "ln2_g": 1.0 + nrm((1, hidden), 0.1),
            "ln2_b": nrm((1, hidden), 0.1),
            "w1": w_bf16((hidden, intermediate)), "b1": nrm((1, intermediate)),
            "w2": w_bf16((intermediate, hidden)), "b2": nrm((1, hidden)),
        }
        params["layers"].append(lp)
    return params


def clip_vision_tower_forward(
    img0, params, *, patch, num_heads, select_layer, select_feature, seq_tile=None
):
    """img0: (B, C, H, W) float32 NCHW. Returns selected hidden-state features."""
    B, C, Himg, Wimg = img0.shape
    ph = pw = patch
    Hp, Wp = Himg // ph, Wimg // pw
    P = Hp * Wp
    D = params["patch_w"].shape[1]
    S = P + 1                                   # +1 for [CLS]

    if seq_tile is None:
        S_pad, seq_tile = _choose_seq_tiling(S, B)
    else:
        S_pad = _round_up(S, seq_tile)

    # --- patch embedding (conv with stride == kernel) as a matmul over flattened patches ---
    K = C * ph * pw
    K_pad = _round_up(K, 128)                   # aligned contraction dim
    x = img0.reshape(B, C, Hp, ph, Wp, pw)
    x = jnp.transpose(x, (0, 2, 4, 1, 3, 5))    # (B, Hp, Wp, C, ph, pw)
    patches = x.reshape(B * P, K).astype(jnp.bfloat16)
    w = params["patch_w"]
    if K_pad > K:
        patches = jnp.pad(patches, ((0, 0), (0, K_pad - K)))
        w = jnp.pad(w, ((0, K_pad - K), (0, 0)))
    patch_embeds = patch_embed_matmul(patches, w).reshape(B, P, D)

    # --- [CLS] token + position embeddings, padded out to S_pad tokens ---
    cls = jnp.broadcast_to(params["cls"][None, None, :], (B, 1, D)).astype(jnp.float32)
    emb = jnp.concatenate([cls, patch_embeds], axis=1) + params["pos"][None, :, :]
    if S_pad > S:
        emb = jnp.pad(emb, ((0, 0), (0, S_pad - S), (0, 0)))

    # --- pre_layrnorm (bf16 hidden states carried between layers) ---
    h = pre_layernorm(emb, params["pre_ln_g"], params["pre_ln_b"], seq_tile=seq_tile)

    # --- encoder: run only up to the selected hidden state ---
    n_layers = len(params["layers"])
    idx = select_layer if select_layer >= 0 else n_layers + 1 + select_layer
    assert 0 <= idx <= n_layers, f"select_layer {select_layer} out of range"
    for li in range(idx):
        h = encoder_layer(h, params["layers"][li],
                          num_heads=num_heads, seq_tile=seq_tile, seq_valid=S)

    feats = h[:, :S]                            # drop sequence padding
    if select_feature == "patch":
        feats = feats[:, 1:]
    elif select_feature == "cls_patch":
        pass
    else:
        raise ValueError(f"Unexpected select feature: {select_feature}")
    return feats.astype(img0.dtype)


# --------------------------------------------------------------------------------------
if __name__ == "__main__":
    # Small synthetic CLIP-ViT config.
    B, C, IMG, PATCH = 2, 3, 16, 4           # -> 4x4 = 16 patches, seq = 17 (with CLS)
    HIDDEN, HEADS, INTER, LAYERS = 64, 4, 128, 3
    SELECT_LAYER, SELECT_FEATURE = -2, "patch"
    SEQ_TILE = 8                              # 17 -> padded to 24; attn grid = (2, 3, 3)

    key = jax.random.PRNGKey(0)
    k_img, k_par = jax.random.split(key)
    img0 = jax.random.normal(k_img, (B, C, IMG, IMG), dtype=jnp.float32)

    # TODO(synk): pretrained-checkpoint loading / CLIPImageProcessor preprocessing have no
    # Pallas equivalent; parameters are synthesized deterministically instead.
    params = init_params(
        k_par,
        channels=C, patch=PATCH, num_patches=(IMG // PATCH) ** 2,
        hidden=HIDDEN, intermediate=INTER, layers=LAYERS,
    )

    out = clip_vision_tower_forward(
        img0, params,
        patch=PATCH, num_heads=HEADS,
        select_layer=SELECT_LAYER, select_feature=SELECT_FEATURE,
        seq_tile=SEQ_TILE,
    )
    out = jax.block_until_ready(out)
    assert out.shape == (B, (IMG // PATCH) ** 2, HIDDEN), out.shape
    assert out.dtype == img0.dtype
    print("KERNEL_OK")
</pallas_src>

<mosaic_0001>
module attributes {stable_mosaic.version = 11 : i64} {
  func.func @_copy(%arg0: i32, %arg1: memref<8x128xf32, #tpu.memory_space<vmem>>, %arg2: memref<8x128xf32, #tpu.memory_space<vmem>>) attributes {dimension_semantics = [#tpu.dimension_semantics<arbitrary>], iteration_bounds = array<i64: 1>, scalar_prefetch = 0 : i64, scratch_operands = 0 : i64, tpu.core_type = #tpu.core_type<tc>, window_params = [{pipeline_mode = #tpu.pipeline_mode<synchronous>, transform_indices = @transform_0, window_bounds = array<i64: 8, 128>}, {pipeline_mode = #tpu.pipeline_mode<synchronous>, transform_indices = @transform_1, window_bounds = array<i64: 8, 128>}]} {
    %c0 = arith.constant 0 : index
    %c0_0 = arith.constant 0 : index
    %0 = vector.load %arg1[%c0, %c0_0] : memref<8x128xf32, #tpu.memory_space<vmem>>, vector<8x128xf32>
    %c0_1 = arith.constant 0 : index
    %c0_2 = arith.constant 0 : index
    %1 = vector.load %arg2[%c0_1, %c0_2] : memref<8x128xf32, #tpu.memory_space<vmem>>, vector<8x128xf32>
    tpu.vector_store %arg2[%c0_1, %c0_2], %0 {strides = array<i32>} : memref<8x128xf32, #tpu.memory_space<vmem>>, vector<8x128xf32>,
    return
  }
  func.func @transform_0(%arg0: i32) -> (i32, i32) {
    %c0_i32 = arith.constant 0 : i32
    %c0_i32_0 = arith.constant 0 : i32
    %c0_i32_1 = arith.constant 0 : i32
    return %c0_i32, %c0_i32_0 : i32, i32
  }
  func.func @transform_1(%arg0: i32) -> (i32, i32) {
    %c0_i32 = arith.constant 0 : i32
    %c0_i32_0 = arith.constant 0 : i32
    %c0_i32_1 = arith.constant 0 : i32
    return %c0_i32, %c0_i32_0 : i32, i32
  }
}

module attributes {stable_mosaic.version = 11 : i64} {
  func.func @matmul_kernel(%arg0: i32, %arg1: memref<32x128xbf16, #tpu.memory_space<vmem>>, %arg2: memref<128x64xbf16, #tpu.memory_space<vmem>>, %arg3: memref<32x64xf32, #tpu.memory_space<vmem>>) attributes {dimension_semantics = [#tpu.dimension_semantics<parallel>], iteration_bounds = array<i64: 1>, scalar_prefetch = 0 : i64, scratch_operands = 0 : i64, tpu.core_type = #tpu.core_type<tc>, window_params = [{transform_indices = @transform_0, window_bounds = array<i64: 32, 128>}, {pipeline_mode = #tpu.pipeline_mode<synchronous>, transform_indices = @transform_1, window_bounds = array<i64: 128, 64>}, {transform_indices = @transform_2, window_bounds = array<i64: 32, 64>}]} {
    %c0 = arith.constant 0 : index
    %c0_0 = arith.constant 0 : index
    %0 = vector.load %arg1[%c0, %c0_0] : memref<32x128xbf16, #tpu.memory_space<vmem>>, vector<32x128xbf16>
    %c0_1 = arith.constant 0 : index
    %c0_2 = arith.constant 0 : index
    %1 = vector.load %arg2[%c0_1, %c0_2] : memref<128x64xbf16, #tpu.memory_space<vmem>>, vector<128x64xbf16>
    %cst = arith.constant dense<0.000000e+00> : vector<32x64xf32>
    %2 = tpu.matmul %0, %1, %cst {dimension_numbers = #tpu.dot_dimension_numbers<[1], [0], [0], [1], [0, 0, 1, 1], [], []>} : vector<32x128xbf16>, vector<128x64xbf16>, vector<32x64xf32> -> vector<32x64xf32>
    %c0_3 = arith.constant 0 : index
    %c0_4 = arith.constant 0 : index
    %3 = vector.load %arg3[%c0_3, %c0_4] : memref<32x64xf32, #tpu.memory_space<vmem>>, vector<32x64xf32>
    tpu.vector_store %arg3[%c0_3, %c0_4], %2 {strides = array<i32>} : memref<32x64xf32, #tpu.memory_space<vmem>>, vector<32x64xf32>,
    return
  }
  func.func @transform_0(%arg0: i32) -> (i32, i32) {
    %c0_i32 = arith.constant 0 : i32
    %c0_i32_0 = arith.constant 0 : i32
    return %arg0, %c0_i32 : i32, i32
  }
  func.func @transform_1(%arg0: i32) -> (i32, i32) {
    %c0_i32 = arith.constant 0 : i32
    %c0_i32_0 = arith.constant 0 : i32
    %c0_i32_1 = arith.constant 0 : i32
    return %c0_i32, %c0_i32_0 : i32, i32
  }
  func.func @transform_2(%arg0: i32) -> (i32, i32) {
    %c0_i32 = arith.constant 0 : i32
    %c0_i32_0 = arith.constant 0 : i32
    return %arg0, %c0_i32 : i32, i32
  }
}

</mosaic_0001>

<llo_original>
// kernel: tpu_custom_call.1
$region0: #{tpu_custom_call.1}
  #allocation0 [shape = 'u32[]', space=smem, size = 0x4, offset = 0x4, fixed_abs, tag = 'smem constant byte address 0x4 - core index']
  #allocation1 [shape = 'u32[144,128]{1,0:T(1,128)}', space=vmem, size = 0x12000, scoped, tag = 'internal scratch']
  %s0 = inlined_call_operand.hbm [shape: f32[8,128], index: 0, kind: input, shape index: {}]
  %s1 = inlined_call_operand.hbm [shape: f32[8,128], index: 1, kind: output, shape index: {}]
  %s2 = sld [smem:[#allocation0]]
  $region18: #{tpu_custom_call.1} parent=0
    _
  %s4 = ssub.s32 1, %s2
  %s5 = scalar_select 0, %s4, %s2
  $region1: #{tpu_custom_call.1} parent=0
    #allocation2 [shape = 'u8[4096]{0}', space=vmem, size = 0x1000, scoped, tag = 'input window, operand 0, single buffered']
    #allocation3 [shape = 's32[1]{0}', space=sflag, size = 0x4, scoped, tag = 'scoped memory for tpu_custom_call.1']
    #allocation4 [shape = 's32[1]{0}', space=sflag, size = 0x4, scoped, tag = 'scoped memory for tpu_custom_call.1']
    #allocation5 [shape = 'u8[4096]{0}', space=vmem, size = 0x1000, scoped, tag = 'output window, operand 0, single buffered']
    %6 = vsyncpa [#allocation3], 0
    %7 = vsyncpa [#allocation4], 0
    // Predicated region
    $region2: #{tpu_custom_call.1} parent=1 // pred_check
      _
    $region3: #{tpu_custom_call.1} parent=1 // pred_check_branch
      %9 = sbr.rel (0) target = $region5
    $region4: #{tpu_custom_call.1} parent=1 // pred_region
      %s11 = ssub.s32 128, 128
      %12 = vsyncadd [#allocation3], %s11
      %s14 = sshll.u32 [#allocation2], 4
      %s15 = int_to_ptr.vmem [resolvable:$true] %s14
      %17 = dma.hbm_to_vmem [thread:$0]  %s0, 128, %s15, [#allocation3]
    $region5: #{tpu_custom_call.1} parent=1 // pred_fallthru
      _
    // Predicated region
    $region6: #{tpu_custom_call.1} parent=1 // pred_check
      _
    $region7: #{tpu_custom_call.1} parent=1 // pred_check_branch
      %19 = sbr.rel (0) target = $region9
    $region8: #{tpu_custom_call.1} parent=1 // pred_region
      %20 = dma.done [#allocation3], 128
    $region9: #{tpu_custom_call.1} parent=1 // pred_fallthru
      _
    %v21 = vld [vmem:[#allocation2] sm:$0xff]
    %22 = vst [vmem:[#allocation5] sm:$0xff] %v21
    // Predicated region
    $region10: #{tpu_custom_call.1} parent=1 // pred_check
      _
    $region11: #{tpu_custom_call.1} parent=1 // pred_check_branch
      %24 = sbr.rel (0) target = $region13
    $region12: #{tpu_custom_call.1} parent=1 // pred_region
      %s26 = ssub.s32 128, 128
      %27 = vsyncadd [#allocation4], %s26
      %s29 = sshll.u32 [#allocation5], 4
      %s30 = int_to_ptr.vmem [resolvable:$true] %s29
      %32 = dma.vmem_to_hbm [thread:$0]  %s30, 128, %s1, [#allocation4]
    $region13: #{tpu_custom_call.1} parent=1 // pred_fallthru
      _
    // Predicated region
    $region14: #{tpu_custom_call.1} parent=1 // pred_check
      _
    $region15: #{tpu_custom_call.1} parent=1 // pred_check_branch
      %34 = sbr.rel (0) target = $region17
    $region16: #{tpu_custom_call.1} parent=1 // pred_region
      %35 = dma.done [#allocation4], 128
    $region17: #{tpu_custom_call.1} parent=1 // pred_fallthru
      _
    %36 = vsyncpa [#allocation3], 1
    %37 = vsyncpa [#allocation4], 1

// kernel: tpu_custom_call.1
$region0: #{tpu_custom_call.1}
  #allocation0 [shape = 'u32[]', space=smem, size = 0x4, offset = 0x4, fixed_abs, tag = 'smem constant byte address 0x4 - core index']
  #allocation1 [shape = 'u32[144,128]{1,0:T(1,128)}', space=vmem, size = 0x12000, scoped, tag = 'internal scratch']
  %s0 = inlined_call_operand.hbm [shape: bf16[32,128], index: 0, kind: input, shape index: {}]
  %s1 = inlined_call_operand.hbm [shape: bf16[128,64], index: 1, kind: input, shape index: {}]
  %s2 = inlined_call_operand.hbm [shape: f32[32,64], index: 2, kind: output, shape index: {}]
  %s3 = sld [smem:[#allocation0]]
  $region26: #{tpu_custom_call.1} parent=0
    _
  %s5 = ssub.s32 1, %s3
  %s6 = scalar_select 0, %s5, %s3
  $region1: #{tpu_custom_call.1} parent=0
    #allocation2 [shape = 'u8[8192]{0}', space=vmem, size = 0x2000, scoped, tag = 'input window, operand 0, single buffered']
    #allocation3 [shape = 's32[1]{0}', space=sflag, size = 0x4, scoped, tag = 'scoped memory for tpu_custom_call.1']
    #allocation4 [shape = 's32[1]{0}', space=sflag, size = 0x4, scoped, tag = 'scoped memory for tpu_custom_call.1']
    #allocation5 [shape = 'u8[32768]{0}', space=vmem, size = 0x8000, scoped, tag = 'input window, operand 1, single buffered']
    #allocation6 [shape = 's32[1]{0}', space=sflag, size = 0x4, scoped, tag = 'scoped memory for tpu_custom_call.1']
    #allocation7 [shape = 'u8[16384]{0}', space=vmem, size = 0x4000, scoped, tag = 'output window, operand 0, single buffered']
    %7 = vsyncpa [#allocation3], 0
    %8 = vsyncpa [#allocation6], 0
    %9 = vsyncpa [#allocation4], 0
    // Predicated region
    $region2: #{tpu_custom_call.1} parent=1 // pred_check
      _
    $region3: #{tpu_custom_call.1} parent=1 // pred_check_branch
      %11 = sbr.rel (0) target = $region5
    $region4: #{tpu_custom_call.1} parent=1 // pred_region
      %s13 = ssub.s32 256, 256
      %14 = vsyncadd [#allocation3], %s13
      %s15 = sshll.u32 [#allocation2], 4
      %s16 = int_to_ptr.vmem [resolvable:$true] %s15
      %21 = dma.hbm_to_vmem [thread:$0]  %s0, 256, %s16, [#allocation3], 64, 64, 4
    $region5: #{tpu_custom_call.1} parent=1 // pred_fallthru
      _
    // Predicated region
    $region6: #{tpu_custom_call.1} parent=1 // pred_check
      _
    $region7: #{tpu_custom_call.1} parent=1 // pred_check_branch
      %23 = sbr.rel (0) target = $region9
    $region8: #{tpu_custom_call.1} parent=1 // pred_region
      %s25 = ssub.s32 1024, 1024
      %26 = vsyncadd [#allocation6], %s25
      %s27 = sshll.u32 [#allocation5], 4
      %s28 = int_to_ptr.vmem [resolvable:$true] %s27
      %33 = dma.hbm_to_vmem [thread:$0]  %s1, 1024, %s28, [#allocation6], 64, 64, 4
    $region9: #{tpu_custom_call.1} parent=1 // pred_fallthru
      _
    // Predicated region
    $region10: #{tpu_custom_call.1} parent=1 // pred_check
      _
    $region11: #{tpu_custom_call.1} parent=1 // pred_check_branch
      %35 = sbr.rel (0) target = $region13
    $region12: #{tpu_custom_call.1} parent=1 // pred_region
      %36 = dma.done [#allocation3], 256
    $region13: #{tpu_custom_call.1} parent=1 // pred_fallthru
      _
    // Predicated region
    $region14: #{tpu_custom_call.1} parent=1 // pred_check
      _
    $region15: #{tpu_custom_call.1} parent=1 // pred_check_branch
      %38 = sbr.rel (0) target = $region17
    $region16: #{tpu_custom_call.1} parent=1 // pred_region
      %39 = dma.done [#allocation6], 1024
    $region17: #{tpu_custom_call.1} parent=1 // pred_fallthru
      _
    %v41 = vld [vmem:[#allocation2] sm:$0xf]
    %v42 = vld [vmem:[#allocation2 + $0x4] sm:$0xf]
    %v43 = vld [vmem:[#allocation2 + $0x8] sm:$0xf]
    %v44 = vld [vmem:[#allocation2 + $0xc] sm:$0xf]
    %v45 = vld [vmem:[#allocation5] sm:$0xf]
    %v46 = vld [vmem:[#allocation5 + $0x4] sm:$0xf]
    %v47 = vld [vmem:[#allocation5 + $0x8] sm:$0xf]
    %v48 = vld [vmem:[#allocation5 + $0xc] sm:$0xf]
    %v49 = vld [vmem:[#allocation5 + $0x10] sm:$0xf]
    %v50 = vld [vmem:[#allocation5 + $0x14] sm:$0xf]
    %v51 = vld [vmem:[#allocation5 + $0x18] sm:$0xf]
    %v52 = vld [vmem:[#allocation5 + $0x1c] sm:$0xf]
    %v53 = vld [vmem:[#allocation5 + $0x20] sm:$0xf]
    %v54 = vld [vmem:[#allocation5 + $0x24] sm:$0xf]
    %v55 = vld [vmem:[#allocation5 + $0x28] sm:$0xf]
    %v56 = vld [vmem:[#allocation5 + $0x2c] sm:$0xf]
    %v57 = vld [vmem:[#allocation5 + $0x30] sm:$0xf]
    %v58 = vld [vmem:[#allocation5 + $0x34] sm:$0xf]
    %v59 = vld [vmem:[#allocation5 + $0x38] sm:$0xf]
    %v60 = vld [vmem:[#allocation5 + $0x3c] sm:$0xf]
    %v65 = vunpack.c.l.b16 %v41
    %v66 = vunpack.c.l.b16 %v42
    %v67 = vunpack.c.l.b16 %v43
    %v68 = vunpack.c.l.b16 %v44
    %v69 = vpack.c.b16 %v66, %v65
    %v70 = vpack.c.b16 %v68, %v67
    %v89 = vunpack.c.l.b16 %v45
    %v90 = vunpack.c.l.b16 %v46
    %v91 = vunpack.c.l.b16 %v47
    %v92 = vunpack.c.l.b16 %v48
    %v93 = vunpack.c.l.b16 %v49
    %v94 = vunpack.c.l.b16 %v50
    %v95 = vunpack.c.l.b16 %v51
    %v96 = vunpack.c.l.b16 %v52
    %v97 = vunpack.c.l.b16 %v53
    %v98 = vunpack.c.l.b16 %v54
    %v99 = vunpack.c.l.b16 %v55
    %v100 = vunpack.c.l.b16 %v56
    %v101 = vunpack.c.l.b16 %v57
    %v102 = vunpack.c.l.b16 %v58
    %v103 = vunpack.c.l.b16 %v59
    %v104 = vunpack.c.l.b16 %v60
    %v105 = vpack.c.b16 %v90, %v89
    %v106 = vpack.c.b16 %v92, %v91
    %v107 = vpack.c.b16 %v94, %v93
    %v108 = vpack.c.b16 %v96, %v95
    %v109 = vpack.c.b16 %v98, %v97
    %v110 = vpack.c.b16 %v100, %v99
    %v111 = vpack.c.b16 %v102, %v101
    %v112 = vpack.c.b16 %v104, %v103
    %121 = vmatprep.subr.bf16.mxu0 0
    %122 = vmatpush1.bf16.msra.mxu0 %v105
    %123 = vmatprep.subr.bf16.mxu0 0
    %124 = vmatpush1.bf16.msra.mxu0 %v106
    %125 = vmatprep.subr.bf16.mxu0 0
    %126 = vmatpush1.bf16.msra.mxu0 %v107
    %127 = vmatprep.subr.bf16.mxu0 0
    %128 = vmatpush1.bf16.msra.mxu0 %v108
    %129 = vmatprep.subr.bf16.mxu0 0
    %130 = vmatpush1.bf16.msra.mxu0 %v109
    %131 = vmatprep.subr.bf16.mxu0 0
    %132 = vmatpush1.bf16.msra.mxu0 %v110
    %133 = vmatprep.subr.bf16.mxu0 0
    %134 = vmatpush1.bf16.msra.mxu0 %v111
    %135 = vmatprep.subr.bf16.mxu0 0
    %136 = vmatpush1.bf16.msra.mxu0 %v112
    %137 = vmatprep.subr.bf16.mxu0 0
    %138 = vmatpush1.bf16.msra.mxu0 0
    %139 = vmatprep.subr.bf16.mxu0 0
    %140 = vmatpush1.bf16.msra.mxu0 0
    %141 = vmatprep.subr.bf16.mxu0 0
    %142 = vmatpush1.bf16.msra.mxu0 0
    %143 = vmatprep.subr.bf16.mxu0 0
    %144 = vmatpush1.bf16.msra.mxu0 0
    %145 = vmatprep.subr.bf16.mxu0 0
    %146 = vmatpush1.bf16.msra.mxu0 0
    %147 = vmatprep.subr.bf16.mxu0 0
    %148 = vmatpush1.bf16.msra.mxu0 0
    %149 = vmatprep.subr.bf16.mxu0 0
    %150 = vmatpush1.bf16.msra.mxu0 0
    %151 = vmatprep.subr.bf16.mxu0 0
    %152 = vmatpush1.bf16.msra.mxu0 0
    %153 = vmatprep.mubr.bf16.mxu0 0
    %154 = vmatmul.mubr.bf16.gmra.mrb[0].mxu0 %v69
    %v155 = vpop.f32.mrb[0].mxu0
    %v156 = vadd.f32 0.0, %v155
    %v157 = vpop.f32.mrb[0].mxu0
    %v158 = vpop.f32.mrb[0].mxu0
    %v159 = vadd.f32 0.0, %v158
    %v160 = vpop.f32.mrb[0].mxu0
    %161 = vmatprep.mubr.bf16.mxu0 0
    %162 = vmatmul.mubr.bf16.gmra.mrb[0].mxu0 %v70
    %v163 = vpop.f32.mrb[0].mxu0
    %v164 = vadd.f32 0.0, %v163
    %v165 = vpop.f32.mrb[0].mxu0
    %v166 = vpop.f32.mrb[0].mxu0
    %v167 = vadd.f32 0.0, %v166
    %v168 = vpop.f32.mrb[0].mxu0
    %169 = vdwg.mxu0
    %vm170 = vcmask 523264
    %171 = vst.msk [vmem:[#allocation7] sm:$0xff] %vm170, %v156
    %172 = vst.msk [vmem:[#allocation7 + $0x8] sm:$0xff] %vm170, %v159
    %173 = vst.msk [vmem:[#allocation7 + $0x10] sm:$0xff] %vm170, %v164
    %174 = vst.msk [vmem:[#allocation7 + $0x18] sm:$0xff] %vm170, %v167
    // Predicated region
    $region18: #{tpu_custom_call.1} parent=1 // pred_check
      _
    $region19: #{tpu_custom_call.1} parent=1 // pred_check_branch
      %176 = sbr.rel (0) target = $region21
    $region20: #{tpu_custom_call.1} parent=1 // pred_region
      %s178 = ssub.s32 512, 512
      %179 = vsyncadd [#allocation4], %s178
      %s180 = sshll.u32 [#allocation7], 4
      %s181 = int_to_ptr.vmem [resolvable:$true] %s180
      %186 = dma.vmem_to_hbm [thread:$0]  %s181, 512, %s2, [#allocation4], 128, 128, 8
    $region21: #{tpu_custom_call.1} parent=1 // pred_fallthru
      _
    // Predicated region
    $region22: #{tpu_custom_call.1} parent=1 // pred_check
      _
    $region23: #{tpu_custom_call.1} parent=1 // pred_check_branch
      %188 = sbr.rel (0) target = $region25
    $region24: #{tpu_custom_call.1} parent=1 // pred_region
      %189 = dma.done [#allocation4], 512
    $region25: #{tpu_custom_call.1} parent=1 // pred_fallthru
      _
    %190 = vsyncpa [#allocation3], 1
    %191 = vsyncpa [#allocation6], 1
    %192 = vsyncpa [#allocation4], 1

</llo_original>
